<compile_context>
chip_gen: v6e
topology: v6e:2x2x1
jax: 0.10.0
libtpu: 0.0.40
codegen_flags: <defaults>
</compile_context>

<pallas_src>
import jax
import jax.numpy as jnp
import numpy as np
from jax.experimental import pallas as pl
from jax.experimental.pallas import tpu as pltpu

_LANE = 128          # lane width of a vreg
_MAX_BLOCK_ROWS = 512  # sublane rows per grid step (512x128 f32 = 256 KiB/plane)


def _expectation_z0_kernel(th_ref, out_ref):
    """Closed-form <Z(0)> for Rx(t1) @ Ry(t0) |0>.

    th_ref  : (2, SUB, 128) float32 VMEM tile; th_ref[0]=ry angles, [1]=rx angles
    out_ref : (SUB, 128)    float32 VMEM tile (lane-dense, batch on lanes)
    """
    # TODO(synk): general SpinOperator expectation not implemented; Z(0) assumed.
    out_ref[...] = jnp.cos(th_ref[0]) * jnp.cos(th_ref[1])


def _round_up(x: int, m: int) -> int:
    return ((x + m - 1) // m) * m


def quantum_layer_forward(thetas: jax.Array, *, block_rows: int = _MAX_BLOCK_ROWS) -> jax.Array:
    """Pallas equivalent of QuantumLayer.forward: (B, >=2) -> (B, 1) expectations."""
    thetas = jnp.asarray(thetas, dtype=jnp.float32)
    B, P = thetas.shape
    assert P >= 2, "circuit uses thetas[:, 0] (ry) and thetas[:, 1] (rx)"

    # Lane-dense layout: flatten batch onto a (rows, 128) slab.
    rows = pl.cdiv(B, _LANE)
    sub = min(block_rows, _round_up(rows, 8))      # sublane tile, multiple of 8
    rows_pad = _round_up(rows, sub)
    b_pad = rows_pad * _LANE

    th0 = jnp.pad(thetas[:, 0], (0, b_pad - B)).reshape(rows_pad, _LANE)
    th1 = jnp.pad(thetas[:, 1], (0, b_pad - B)).reshape(rows_pad, _LANE)
    th = jnp.stack([th0, th1], axis=0)             # (2, rows_pad, 128)

    n_blocks = rows_pad // sub
    out2d = pl.pallas_call(
        _expectation_z0_kernel,
        out_shape=jax.ShapeDtypeStruct((rows_pad, _LANE), jnp.float32),
        grid=(n_blocks,),
        in_specs=[pl.BlockSpec((2, sub, _LANE), lambda i: (0, i, 0))],
        out_specs=pl.BlockSpec((sub, _LANE), lambda i: (i, 0)),
        compiler_params=pltpu.CompilerParams(
            dimension_semantics=("parallel",)),
    )(th)

    # Strip padding, restore the (B, 1) interface of the torch module.
    return out2d.reshape(-1)[:B].reshape(B, 1)


class QuantumLayer:
    """Thin wrapper mirroring the PyTorch module interface.

    qubit_count / hamiltonian / shift are kept for interface parity; the
    circuit only touches qubit 0, the observable is fixed to Z(0), and
    `shift` only matters for the parameter-shift backward pass (out of scope
    for a forward kernel).
    """

    def __init__(self, qubit_count: int, hamiltonian=None, shift: float = np.pi / 2):
        self.qubit_count = qubit_count
        self.hamiltonian = hamiltonian
        self.shift = shift

    def __call__(self, thetas: jax.Array) -> jax.Array:
        return quantum_layer_forward(thetas)


if __name__ == "__main__":
    key = jax.random.PRNGKey(0)
    batch = 8
    # One (ry, rx) angle pair per batch element, same as the torch module input.
    thetas = jax.random.uniform(
        key, (batch, 2), dtype=jnp.float32, minval=-np.pi, maxval=np.pi
    )

    layer = QuantumLayer(qubit_count=1, hamiltonian=None, shift=np.pi / 2)
    exp_vals = jax.block_until_ready(layer(thetas))

    # Analytic reference: <Z(0)> = cos(theta0) * cos(theta1), shape (B, 1).
    ref = (jnp.cos(thetas[:, 0]) * jnp.cos(thetas[:, 1])).reshape(-1, 1)
    assert exp_vals.shape == (batch, 1)
    assert np.allclose(np.asarray(exp_vals), np.asarray(ref), atol=1e-5)

    print("KERNEL_OK")
</pallas_src>

<mosaic_0001>
module attributes {stable_mosaic.version = 11 : i64} {
  func.func @_expectation_z0_kernel(%arg0: i32, %arg1: memref<2x8x128xf32, #tpu.memory_space<vmem>>, %arg2: memref<8x128xf32, #tpu.memory_space<vmem>>) attributes {dimension_semantics = [#tpu.dimension_semantics<parallel>], iteration_bounds = array<i64: 1>, scalar_prefetch = 0 : i64, scratch_operands = 0 : i64, tpu.core_type = #tpu.core_type<tc>, window_params = [{transform_indices = @transform_0, window_bounds = array<i64: 2, 8, 128>}, {transform_indices = @transform_1, window_bounds = array<i64: 8, 128>}]} {
    %c0 = arith.constant 0 : index
    %c0_0 = arith.constant 0 : index
    %c0_1 = arith.constant 0 : index
    %0 = vector.load %arg1[%c0, %c0_0, %c0_1] : memref<2x8x128xf32, #tpu.memory_space<vmem>>, vector<1x8x128xf32>
    %1 = vector.shape_cast %0 : vector<1x8x128xf32> to vector<8x128xf32>
    %2 = math.cos %1 : vector<8x128xf32>
    %c1 = arith.constant 1 : index
    %c0_2 = arith.constant 0 : index
    %c0_3 = arith.constant 0 : index
    %3 = vector.load %arg1[%c1, %c0_2, %c0_3] : memref<2x8x128xf32, #tpu.memory_space<vmem>>, vector<1x8x128xf32>
    %4 = vector.shape_cast %3 : vector<1x8x128xf32> to vector<8x128xf32>
    %5 = math.cos %4 : vector<8x128xf32>
    %6 = arith.mulf %2, %5 : vector<8x128xf32>
    %c0_4 = arith.constant 0 : index
    %c0_5 = arith.constant 0 : index
    %7 = vector.load %arg2[%c0_4, %c0_5] : memref<8x128xf32, #tpu.memory_space<vmem>>, vector<8x128xf32>
    tpu.vector_store %arg2[%c0_4, %c0_5], %6 {strides = array<i32>} : memref<8x128xf32, #tpu.memory_space<vmem>>, vector<8x128xf32>,
    return
  }
  func.func @transform_0(%arg0: i32) -> (i32, i32, i32) {
    %c0_i32 = arith.constant 0 : i32
    %c0_i32_0 = arith.constant 0 : i32
    %c0_i32_1 = arith.constant 0 : i32
    return %c0_i32, %arg0, %c0_i32_0 : i32, i32, i32
  }
  func.func @transform_1(%arg0: i32) -> (i32, i32) {
    %c0_i32 = arith.constant 0 : i32
    %c0_i32_0 = arith.constant 0 : i32
    return %arg0, %c0_i32 : i32, i32
  }
}

</mosaic_0001>

<llo_original>
// kernel: tpu_custom_call.1
$region0: #{tpu_custom_call.1}
  #allocation0 [shape = 'u32[]', space=smem, size = 0x4, offset = 0x4, fixed_abs, tag = 'smem constant byte address 0x4 - core index']
  #allocation1 [shape = 'u32[144,128]{1,0:T(1,128)}', space=vmem, size = 0x12000, scoped, tag = 'internal scratch']
  %s0 = inlined_call_operand.hbm [shape: f32[2,8,128], index: 0, kind: input, shape index: {}]
  %s1 = inlined_call_operand.hbm [shape: f32[8,128], index: 1, kind: output, shape index: {}]
  %s2 = sld [smem:[#allocation0]]
  $region18: #{tpu_custom_call.1} parent=0
    _
  %s4 = ssub.s32 1, %s2
  %s5 = scalar_select 0, %s4, %s2
  $region1: #{tpu_custom_call.1} parent=0
    #allocation2 [shape = 'u8[8192]{0}', space=vmem, size = 0x2000, scoped, tag = 'input window, operand 0, single buffered']
    #allocation3 [shape = 's32[1]{0}', space=sflag, size = 0x4, scoped, tag = 'scoped memory for tpu_custom_call.1']
    #allocation4 [shape = 's32[1]{0}', space=sflag, size = 0x4, scoped, tag = 'scoped memory for tpu_custom_call.1']
    #allocation5 [shape = 'u8[4096]{0}', space=vmem, size = 0x1000, scoped, tag = 'output window, operand 0, single buffered']
    %6 = vsyncpa [#allocation3], 0
    %7 = vsyncpa [#allocation4], 0
    // Predicated region
    $region2: #{tpu_custom_call.1} parent=1 // pred_check
      _
    $region3: #{tpu_custom_call.1} parent=1 // pred_check_branch
      %9 = sbr.rel (0) target = $region5
    $region4: #{tpu_custom_call.1} parent=1 // pred_region
      %s11 = ssub.s32 256, 256
      %12 = vsyncadd [#allocation3], %s11
      %s13 = sshll.u32 [#allocation2], 4
      %s14 = int_to_ptr.vmem [resolvable:$true] %s13
      %19 = dma.hbm_to_vmem [thread:$0]  %s0, 256, %s14, [#allocation3], 128, 128, 8
    $region5: #{tpu_custom_call.1} parent=1 // pred_fallthru
      _
    // Predicated region
    $region6: #{tpu_custom_call.1} parent=1 // pred_check
      _
    $region7: #{tpu_custom_call.1} parent=1 // pred_check_branch
      %21 = sbr.rel (0) target = $region9
    $region8: #{tpu_custom_call.1} parent=1 // pred_region
      %22 = dma.done [#allocation3], 256
    $region9: #{tpu_custom_call.1} parent=1 // pred_fallthru
      _
    %v23 = vld [vmem:[#allocation2] sm:$0xff]
    %v24 = vand.u32 2147483647, %v23
    %vm25 = vcmp.le.f32.partialorder %v24, 0.7853982
    %vm26 = vcmp.lt.s32.totalorder %v23, 0
    %v27 = vand.u32 %v23, 2139095040
    %v28 = vshrl.u32 %v27, 23
    %v29 = vsub.s32 %v28, 127
    %v30 = vand.u32 2147483647, %v23
    %v31 = vand.u32 %v30, 8388607
    %v32 = vor.u32 %v31, 8388608
    %v33 = vsub.s32 0, %v32
    %v34 = vadd.s32 %v29, 1
    %vm35 = vcmp.gt.s32.totalorder %v34, 0
    %v36 = vsel %vm35, %v34, 0
    %v37 = vshrl.u32 %v36, 5
    %v38 = vand.u32 %v36, 31
    %v39 = vsub.s32 32, %v38
    %v40 = vshrl.u32 683565275, %v39
    %v41 = vshll.u32 683565275, %v38
    %v42 = vshrl.u32 2475754826, %v39
    %v43 = vor.u32 %v41, %v42
    %v44 = vshll.u32 2475754826, %v38
    %v45 = vshrl.u32 2131351028, %v39
    %v46 = vor.u32 %v44, %v45
    %v47 = vshll.u32 2131351028, %v38
    %v48 = vshrl.u32 2102212464, %v39
    %v49 = vor.u32 %v47, %v48
    %v50 = vshll.u32 2102212464, %v38
    %v51 = vshrl.u32 920167782, %v39
    %v52 = vor.u32 %v50, %v51
    %v53 = vshll.u32 920167782, %v38
    %v54 = vshrl.u32 1326507024, %v39
    %v55 = vor.u32 %v53, %v54
    %vm56 = vcmp.lt.s32.totalorder %v37, 1
    %vm57 = vcmp.lt.s32.totalorder %v37, 2
    %vm58 = vcmp.lt.s32.totalorder %v37, 3
    %vm59 = vcmp.lt.s32.totalorder %v37, 4
    %v60 = vsel %vm56, %v40, %v43
    %v61 = vsel %vm59, %v49, 2102212464
    %v62 = vsel %vm58, %v46, %v61
    %v63 = vsel %vm57, %v60, %v62
    %v64 = vsel %vm56, %v43, %v46
    %v65 = vsel %vm59, %v52, 920167782
    %v66 = vsel %vm58, %v49, %v65
    %v67 = vsel %vm57, %v64, %v66
    %v68 = vsel %vm56, %v46, %v49
    %v69 = vsel %vm59, %v55, 1326507024
    %v70 = vsel %vm58, %v52, %v69
    %v71 = vsel %vm57, %v68, %v70
    %v72 = vshll.u32 %v32, 8
    %v73 = vmul.u32.u64.compose %v72, %v71
    %v74 = vextract.low.u32 %v73
    %v75 = vextract.high.u32 %v73
    %v76 = vmul.u32.u64.compose %v72, %v67
    %v77 = vextract.low.u32 %v76
    %v78 = vextract.high.u32 %v76
    %v79 = vmul.u32 %v72, %v63
    %v80 = vadd.s32 %v75, %v77
    %vm81 = vc.u32 %v75, %v77
    %v82 = vadd.s32 %v78, 1
    %v83 = vsel %vm81, %v82, %v78
    %v84 = vadd.s32 %v79, %v83
    %v85 = vadd.s32 %v84, 536870912
    %v86 = vshrl.u32 %v85, 30
    %v87 = vshll.u32 %v86, 30
    %v88 = vsub.s32 %v84, %v87
    %vm89 = vcmp.lt.s32.totalorder %v88, 0
    %v90 = vsub.s32 0, %v88
    %v91 = vsel %vm89, %v90, %v88
    %v92 = vclz %v91
    %v93 = vsub.s32 %v92, 2
    %vm94 = vcmp.gt.s32.totalorder 0, %v93
    %v95 = vsel %vm94, 0, %v93
    %v96 = vsub.s32 32, %v95
    %v97 = vshll.u32 %v88, %v95
    %v98 = vshrl.u32 %v80, %v96
    %v99 = vor.u32 %v97, %v98
    %v100 = vsub.s32 4294967266, %v95
    %v101 = vadd.s32 %v100, 127
    %v102 = vshll.u32 %v101, 23
    %v103 = vor.u32 4788187, %v102
    %v104 = vand.u32 2147483647, %v103
    %v106 = vcvt.s32.f32 %v99
    %v107 = vmul.f32 %v106, %v104
    %v108 = vxor.u32 %v107, 2147483648
    %v109 = vsel %vm26, %v108, %v107
    %v110 = vsub.s32 4, %v86
    %v111 = vsel %vm26, %v110, %v86
    %v112 = vsel %vm25, %v23, %v109
    %v113 = vsel %vm25, 0, %v111
    %v114 = vcosq.f32.pop %v112
    %v115 = vsinq.f32.pop %v112
    %vm116 = vweird.f32 %v23
    %v117 = vand.u32 %v113, 3
    %vm118 = vcmp.lt.s32.totalorder %v117, 2
    %vm119 = vcmp.eq.s32.totalorder %v117, 0
    %v120 = vxor.u32 %v115, 2147483648
    %v121 = vsel %vm119, %v114, %v120
    %vm122 = vcmp.eq.s32.totalorder %v117, 2
    %v123 = vxor.u32 %v114, 2147483648
    %v124 = vsel %vm122, %v123, %v115
    %v125 = vsel %vm118, %v121, %v124
    %v126 = vsel %vm116, nan, %v125
    %s127 = scalar_lea.vmem [#allocation2], 8
    %v128 = vld [vmem:[%s127] sm:$0xff]
    %v129 = vand.u32 2147483647, %v128
    %vm130 = vcmp.le.f32.partialorder %v129, 0.7853982
    %vm131 = vcmp.lt.s32.totalorder %v128, 0
    %v132 = vand.u32 %v128, 2139095040
    %v133 = vshrl.u32 %v132, 23
    %v134 = vsub.s32 %v133, 127
    %v135 = vand.u32 2147483647, %v128
    %v136 = vand.u32 %v135, 8388607
    %v137 = vor.u32 %v136, 8388608
    %v138 = vsub.s32 0, %v137
    %v139 = vadd.s32 %v134, 1
    %vm140 = vcmp.gt.s32.totalorder %v139, 0
    %v141 = vsel %vm140, %v139, 0
    %v142 = vshrl.u32 %v141, 5
    %v143 = vand.u32 %v141, 31
    %v144 = vsub.s32 32, %v143
    %v145 = vshrl.u32 683565275, %v144
    %v146 = vshll.u32 683565275, %v143
    %v147 = vshrl.u32 2475754826, %v144
    %v148 = vor.u32 %v146, %v147
    %v149 = vshll.u32 2475754826, %v143
    %v150 = vshrl.u32 2131351028, %v144
    %v151 = vor.u32 %v149, %v150
    %v152 = vshll.u32 2131351028, %v143
    %v153 = vshrl.u32 2102212464, %v144
    %v154 = vor.u32 %v152, %v153
    %v155 = vshll.u32 2102212464, %v143
    %v156 = vshrl.u32 920167782, %v144
    %v157 = vor.u32 %v155, %v156
    %v158 = vshll.u32 920167782, %v143
    %v159 = vshrl.u32 1326507024, %v144
    %v160 = vor.u32 %v158, %v159
    %vm161 = vcmp.lt.s32.totalorder %v142, 1
    %vm162 = vcmp.lt.s32.totalorder %v142, 2
    %vm163 = vcmp.lt.s32.totalorder %v142, 3
    %vm164 = vcmp.lt.s32.totalorder %v142, 4
    %v165 = vsel %vm161, %v145, %v148
    %v166 = vsel %vm164, %v154, 2102212464
    %v167 = vsel %vm163, %v151, %v166
    %v168 = vsel %vm162, %v165, %v167
    %v169 = vsel %vm161, %v148, %v151
    %v170 = vsel %vm164, %v157, 920167782
    %v171 = vsel %vm163, %v154, %v170
    %v172 = vsel %vm162, %v169, %v171
    %v173 = vsel %vm161, %v151, %v154
    %v174 = vsel %vm164, %v160, 1326507024
    %v175 = vsel %vm163, %v157, %v174
    %v176 = vsel %vm162, %v173, %v175
    %v177 = vshll.u32 %v137, 8
    %v178 = vmul.u32.u64.compose %v177, %v176
    %v179 = vextract.low.u32 %v178
    %v180 = vextract.high.u32 %v178
    %v181 = vmul.u32.u64.compose %v177, %v172
    %v182 = vextract.low.u32 %v181
    %v183 = vextract.high.u32 %v181
    %v184 = vmul.u32 %v177, %v168
    %v185 = vadd.s32 %v180, %v182
    %vm186 = vc.u32 %v180, %v182
    %v187 = vadd.s32 %v183, 1
    %v188 = vsel %vm186, %v187, %v183
    %v189 = vadd.s32 %v184, %v188
    %v190 = vadd.s32 %v189, 536870912
    %v191 = vshrl.u32 %v190, 30
    %v192 = vshll.u32 %v191, 30
    %v193 = vsub.s32 %v189, %v192
    %vm194 = vcmp.lt.s32.totalorder %v193, 0
    %v195 = vsub.s32 0, %v193
    %v196 = vsel %vm194, %v195, %v193
    %v197 = vclz %v196
    %v198 = vsub.s32 %v197, 2
    %vm199 = vcmp.gt.s32.totalorder 0, %v198
    %v200 = vsel %vm199, 0, %v198
    %v201 = vsub.s32 32, %v200
    %v202 = vshll.u32 %v193, %v200
    %v203 = vshrl.u32 %v185, %v201
    %v204 = vor.u32 %v202, %v203
    %v205 = vsub.s32 4294967266, %v200
    %v206 = vadd.s32 %v205, 127
    %v207 = vshll.u32 %v206, 23
    %v208 = vor.u32 4788187, %v207
    %v209 = vand.u32 2147483647, %v208
    %v211 = vcvt.s32.f32 %v204
    %v212 = vmul.f32 %v211, %v209
    %v213 = vxor.u32 %v212, 2147483648
    %v214 = vsel %vm131, %v213, %v212
    %v215 = vsub.s32 4, %v191
    %v216 = vsel %vm131, %v215, %v191
    %v217 = vsel %vm130, %v128, %v214
    %v218 = vsel %vm130, 0, %v216
    %v219 = vcosq.f32.pop %v217
    %v220 = vsinq.f32.pop %v217
    %vm221 = vweird.f32 %v128
    %v222 = vand.u32 %v218, 3
    %vm223 = vcmp.lt.s32.totalorder %v222, 2
    %vm224 = vcmp.eq.s32.totalorder %v222, 0
    %v225 = vxor.u32 %v220, 2147483648
    %v226 = vsel %vm224, %v219, %v225
    %vm227 = vcmp.eq.s32.totalorder %v222, 2
    %v228 = vxor.u32 %v219, 2147483648
    %v229 = vsel %vm227, %v228, %v220
    %v230 = vsel %vm223, %v226, %v229
    %v231 = vsel %vm221, nan, %v230
    %v232 = vmul.f32 %v126, %v231
    %233 = vst [vmem:[#allocation5] sm:$0xff] %v232
    // Predicated region
    $region10: #{tpu_custom_call.1} parent=1 // pred_check
      _
    $region11: #{tpu_custom_call.1} parent=1 // pred_check_branch
      %235 = sbr.rel (0) target = $region13
    $region12: #{tpu_custom_call.1} parent=1 // pred_region
      %s237 = ssub.s32 128, 128
      %238 = vsyncadd [#allocation4], %s237
      %s240 = sshll.u32 [#allocation5], 4
      %s241 = int_to_ptr.vmem [resolvable:$true] %s240
      %243 = dma.vmem_to_hbm [thread:$0]  %s241, 128, %s1, [#allocation4]
    $region13: #{tpu_custom_call.1} parent=1 // pred_fallthru
      _
    // Predicated region
    $region14: #{tpu_custom_call.1} parent=1 // pred_check
      _
    $region15: #{tpu_custom_call.1} parent=1 // pred_check_branch
      %245 = sbr.rel (0) target = $region17
    $region16: #{tpu_custom_call.1} parent=1 // pred_region
      %246 = dma.done [#allocation4], 128
    $region17: #{tpu_custom_call.1} parent=1 // pred_fallthru
      _
    %247 = vsyncpa [#allocation3], 1
    %248 = vsyncpa [#allocation4], 1

</llo_original>
